<compile_context>
chip_gen: v7x
topology: tpu7x:2x2x1
jax: 0.10.0
libtpu: 0.0.40
codegen_flags: <defaults>
</compile_context>

<pallas_src>
import functools

import jax
import jax.numpy as jnp
from jax import lax
from jax.experimental import pallas as pl
from jax.experimental.pallas import tpu as pltpu

_MIB = 1024 * 1024


def _round_up(v, m):
    return (v + m - 1) // m * m


def _vmem_capacity_bytes():
    """Per-TensorCore VMEM capacity for the current backend (best effort)."""
    try:
        info = pltpu.get_tpu_info()
        cap = getattr(info, "vmem_capacity_bytes", None)
        if cap:
            return int(cap)
    except Exception:
        pass
    try:
        kind = jax.devices()[0].device_kind.lower()
    except Exception:
        return 128 * _MIB
    if "v7" in kind or "tpu7" in kind or "7x" in kind:
        return 64 * _MIB      # v7x: 64 MiB per TensorCore
    return 128 * _MIB         # v4 / v5e / v5p / v6e


def _sae_kernel(x_ref, enc_ref, dec_ref, pad_ref, h_ref, sparse_ref, *,
                k, use_topk, strict_ties, has_pad, l_pad, compute_dtype):
    # latent = einsum('bi,il->bl', x, encoder): MXU matmul, f32 accumulation.
    latent = jnp.dot(
        x_ref[...].astype(compute_dtype),
        enc_ref[...].astype(compute_dtype),
        preferred_element_type=jnp.float32,
    )

    if use_topk:
        neg_inf = jnp.float32(-jnp.inf)
        # Padded latent columns (zero-padded encoder cols) get -inf so they
        # can never participate in the top-k. The mask is a tiny resident
        # (1, L_pad) input -> one broadcast add, no per-step iota.
        masked = latent + pad_ref[...] if has_pad else latent

        if strict_ties:
            # Exact torch.topk semantics: k rounds, lowest column index wins
            # ties, exactly k entries selected. Costs an extra cross-lane
            # reduction per round and a (tb, L_pad) bool carry.
            col = lax.broadcasted_iota(jnp.int32, latent.shape, 1)

            def one_round(carry):
                work, mask = carry
                row_max = jnp.max(work, axis=1, keepdims=True)
                sel = work == row_max
                first = jnp.min(jnp.where(sel, col, l_pad), axis=1,
                                keepdims=True)
                sel = col == first
                return (jnp.where(sel, neg_inf, work),
                        jnp.logical_or(mask, sel))

            work = masked
            mask = jnp.zeros(latent.shape, dtype=jnp.bool_)
            if k <= 8:
                for _ in range(k):
                    work, mask = one_round((work, mask))
            else:
                work, mask = lax.fori_loop(
                    0, k, lambda _, c: one_round(c), (work, mask), unroll=2)
            sparse = jnp.where(mask, latent, 0.0)
        else:
            # Mask-free top-k: remove the row max (k-1) times, then the
            # remaining row max is the k-th largest; threshold the latent.
            def remove_max(work):
                row_max = jnp.max(work, axis=1, keepdims=True)
                return jnp.where(work == row_max, neg_inf, work)

            work = masked
            if k - 1 <= 16:
                # Fully unrolled -> LLO scheduler co-issue visibility.
                for _ in range(k - 1):
                    work = remove_max(work)
            else:
                work = lax.fori_loop(
                    0, k - 1, lambda _, w: remove_max(w), work, unroll=4)
            kth = jnp.max(work, axis=1, keepdims=True)
            sparse = jnp.where(masked >= kth, latent, 0.0)
    else:
        sparse = latent

    sparse_ref[...] = sparse.astype(sparse_ref.dtype)

    # h = einsum('bl,lh->bh', sparse, decoder): MXU matmul, f32 accumulation.
    h = jnp.dot(
        sparse.astype(compute_dtype),
        dec_ref[...].astype(compute_dtype),
        preferred_element_type=jnp.float32,
    )
    h_ref[...] = h.astype(h_ref.dtype)


def _choose_block_b(b8, i_dim, l_pad, h_pad, in_bytes, out_bytes,
                    budget_bytes, weight_bufs):
    """Largest batch tile whose VMEM footprint fits the budget."""
    weights = (weight_bufs * (i_dim * l_pad + l_pad * h_pad) * in_bytes
               + l_pad * 4)
    if weights > budget_bytes:
        raise ValueError(
            f"Resident encoder+decoder ({weights / _MIB:.1f} MiB) exceed the "
            f"VMEM budget ({budget_bytes / _MIB:.1f} MiB). "
            "TODO(synk): add latent-dimension streaming (second 'arbitrary' "
            "grid axis over L with a two-pass top-k) for latent dims this "
            "large.")
    for tb in (1024, 512, 256, 128, 64, 32, 16, 8):
        if tb > b8:
            continue
        tiles = 2 * tb * (i_dim * in_bytes + (h_pad + l_pad) * out_bytes)
        temps = 5 * tb * l_pad * 4  # latent/masked/work/sparse/h (f32-ish)
        if weights + tiles + temps <= budget_bytes:
            return tb
    raise ValueError(
        "No batch tile fits the VMEM budget; raise vmem_budget_bytes or "
        "reduce latent/hidden dims.")


def faithful_sae_forward(x, encoder, decoder, *, k=1, use_topk=True,
                         compute_dtype=jnp.float32,   # bf16 = fast MXU path
                         out_dtype=jnp.float32,
                         strict_ties=False, block_b=None,
                         vmem_budget_bytes=None):
    x = jnp.asarray(x, jnp.float32)
    encoder = jnp.asarray(encoder, jnp.float32)
    decoder = jnp.asarray(decoder, jnp.float32)

    B, I = x.shape
    I_e, L = encoder.shape
    L_d, H = decoder.shape
    assert I == I_e and L == L_d, "shape mismatch between x/encoder/decoder"
    if use_topk:
        assert 1 <= k <= L, f"k={k} must satisfy 1 <= k <= latent_dim={L}"

    compute_dtype = jnp.dtype(compute_dtype)
    out_dtype = jnp.dtype(out_dtype)
    in_bytes = compute_dtype.itemsize
    out_bytes = out_dtype.itemsize

    # Lane-dense outputs: pad latent/hidden dims to multiples of 128.
    L_pad = _round_up(L, 128)
    H_pad = _round_up(H, 128)

    # Generation-aware VMEM budget; vmem_limit derived from it (consistent).
    capacity = _vmem_capacity_bytes()
    if vmem_budget_bytes is None:
        vmem_budget_bytes = int(0.70 * capacity)
    vmem_budget_bytes = int(min(vmem_budget_bytes, capacity - 16 * _MIB))
    vmem_limit_bytes = int(vmem_budget_bytes + 8 * _MIB)

    # Batch tile selection (weights sized single-buffered; see pl.Buffered(1)).
    b8 = _round_up(B, 8)
    tb = block_b if block_b is not None else _choose_block_b(
        b8, I, L_pad, H_pad, in_bytes, out_bytes, vmem_budget_bytes,
        weight_bufs=1)
    tb = min(tb, b8)
    B_pad = _round_up(B, tb)

    # Pad operands (zeros are inert: padded latent cols are masked in-kernel,
    # padded decoder rows multiply zero sparse entries).
    x_p = x if B_pad == B else jnp.pad(x, ((0, B_pad - B), (0, 0)))
    enc_p = encoder if L_pad == L else jnp.pad(encoder, ((0, 0), (0, L_pad - L)))
    dec_p = jnp.pad(decoder, ((0, L_pad - L), (0, H_pad - H))) \
        if (L_pad != L or H_pad != H) else decoder

    # Store/stream weights (and x) in the MXU compute dtype: bf16 halves HBM
    # traffic and resident VMEM while accumulation stays f32.
    if compute_dtype != jnp.float32:
        x_p = x_p.astype(compute_dtype)
        enc_p = enc_p.astype(compute_dtype)
        dec_p = dec_p.astype(compute_dtype)

    # Additive 0 / -inf column mask for padded latent columns (resident).
    pad_mask = jnp.where(jnp.arange(L_pad) < L, 0.0,
                         -jnp.inf).astype(jnp.float32).reshape(1, L_pad)

    kernel = functools.partial(
        _sae_kernel, k=k, use_topk=use_topk, strict_ties=strict_ties,
        has_pad=(L_pad > L), l_pad=L_pad, compute_dtype=compute_dtype)

    flops = int(2 * B_pad * I * L_pad + 2 * B_pad * L_pad * H_pad)
    bytes_accessed = int(
        x_p.size * x_p.dtype.itemsize
        + enc_p.size * enc_p.dtype.itemsize
        + dec_p.size * dec_p.dtype.itemsize
        + B_pad * H_pad * out_bytes + B_pad * L_pad * out_bytes)

    def _call(single_buffer_weights):
        weight_kwargs = (dict(pipeline_mode=pl.Buffered(1))
                         if single_buffer_weights else {})
        in_specs = [
            pl.BlockSpec((tb, I), lambda i: (i, 0)),                 # x: streamed
            pl.BlockSpec((I, L_pad), lambda i: (0, 0), **weight_kwargs),   # encoder
            pl.BlockSpec((L_pad, H_pad), lambda i: (0, 0), **weight_kwargs),  # decoder
            pl.BlockSpec((1, L_pad), lambda i: (0, 0), **weight_kwargs),   # pad mask
        ]
        return pl.pallas_call(
            kernel,
            out_shape=(
                jax.ShapeDtypeStruct((B_pad, H_pad), out_dtype),
                jax.ShapeDtypeStruct((B_pad, L_pad), out_dtype),
            ),
            grid=(B_pad // tb,),
            in_specs=in_specs,
            out_specs=(
                pl.BlockSpec((tb, H_pad), lambda i: (i, 0)),
                pl.BlockSpec((tb, L_pad), lambda i: (i, 0)),
            ),
            compiler_params=pltpu.CompilerParams(
                dimension_semantics=("parallel",),
                vmem_limit_bytes=vmem_limit_bytes,
            ),
            cost_estimate=pl.CostEstimate(
                flops=flops, transcendentals=0,
                bytes_accessed=bytes_accessed),
        )(x_p, enc_p, dec_p, pad_mask)

    try:
        h_p, sparse_p = _call(True)
    except Exception:
        # Fallback for jax versions without BlockSpec(pipeline_mode=Buffered(1)):
        # default double-buffered resident weights (correct, uses 2x weight VMEM).
        h_p, sparse_p = _call(False)

    return h_p[:B, :H], sparse_p[:B, :L]


def _xavier_normal(key, shape):
    fan_in, fan_out = shape
    std = (2.0 / (fan_in + fan_out)) ** 0.5
    return std * jax.random.normal(key, shape, dtype=jnp.float32)


def _reference_forward(x, encoder, decoder, *, k=1, use_topk=True,
                       compute_dtype=jnp.float32):
    latent = jnp.dot(x.astype(compute_dtype), encoder.astype(compute_dtype),
                     preferred_element_type=jnp.float32)
    if use_topk:
        vals, idx = lax.top_k(latent, k)
        rows = jnp.arange(latent.shape[0])[:, None]
        sparse = jnp.zeros_like(latent).at[rows, idx].set(vals)
    else:
        sparse = latent
    h = jnp.dot(sparse.astype(compute_dtype), decoder.astype(compute_dtype),
                preferred_element_type=jnp.float32)
    return h, sparse


if __name__ == "__main__":
    # Small shapes consistent with the module: input_dim=16, latent_dim=32,
    # hidden_dim=8, batch=8, k=2.
    B, INPUT_DIM, LATENT_DIM, HIDDEN_DIM, K = 8, 16, 32, 8, 2

    key = jax.random.PRNGKey(0)
    k_x, k_enc, k_dec = jax.random.split(key, 3)

    x = jax.random.normal(k_x, (B, INPUT_DIM), dtype=jnp.float32)
    encoder = _xavier_normal(k_enc, (INPUT_DIM, LATENT_DIM))
    decoder = _xavier_normal(k_dec, (LATENT_DIM, HIDDEN_DIM))

    # f32 path: matches the PyTorch module exactly.
    h, sparse = faithful_sae_forward(x, encoder, decoder, k=K, use_topk=True)
    jax.block_until_ready((h, sparse))
    h_ref, sparse_ref = _reference_forward(x, encoder, decoder, k=K,
                                           use_topk=True)
    assert h.shape == (B, HIDDEN_DIM) and sparse.shape == (B, LATENT_DIM)
    assert jnp.allclose(h, h_ref, atol=1e-5, rtol=1e-5)
    assert jnp.allclose(sparse, sparse_ref, atol=1e-5, rtol=1e-5)

    # strict torch.topk tie-break path.
    hs, sparses = faithful_sae_forward(x, encoder, decoder, k=K, use_topk=True,
                                       strict_ties=True)
    assert jnp.allclose(hs, h_ref, atol=1e-5, rtol=1e-5)
    assert jnp.allclose(sparses, sparse_ref, atol=1e-5, rtol=1e-5)

    # use_topk=False path.
    h2, sparse2 = faithful_sae_forward(x, encoder, decoder, k=K,
                                       use_topk=False)
    h2_ref, sparse2_ref = _reference_forward(x, encoder, decoder, k=K,
                                             use_topk=False)
    assert jnp.allclose(h2, h2_ref, atol=1e-5, rtol=1e-5)
    assert jnp.allclose(sparse2, sparse2_ref, atol=1e-5, rtol=1e-5)

    # bf16-MXU fast path (f32 accumulation), validated against bf16 reference.
    h3, sparse3 = faithful_sae_forward(x, encoder, decoder, k=K, use_topk=True,
                                       compute_dtype=jnp.bfloat16)
    jax.block_until_ready((h3, sparse3))
    h3_ref, sparse3_ref = _reference_forward(x, encoder, decoder, k=K,
                                             use_topk=True,
                                             compute_dtype=jnp.bfloat16)
    assert jnp.allclose(h3, h3_ref, atol=2e-2, rtol=2e-2)
    assert jnp.allclose(sparse3, sparse3_ref, atol=2e-2, rtol=2e-2)

    print("KERNEL_OK")
</pallas_src>

<mosaic_0001>
module attributes {stable_mosaic.version = 11 : i64} {
  func.func @_sae_kernel(%arg0: i32, %arg1: memref<8x16xf32, #tpu.memory_space<vmem>>, %arg2: memref<16x128xf32, #tpu.memory_space<vmem>>, %arg3: memref<128x128xf32, #tpu.memory_space<vmem>>, %arg4: memref<1x128xf32, #tpu.memory_space<vmem>>, %arg5: memref<8x128xf32, #tpu.memory_space<vmem>>, %arg6: memref<8x128xf32, #tpu.memory_space<vmem>>) attributes {dimension_semantics = [#tpu.dimension_semantics<parallel>], iteration_bounds = array<i64: 1>, scalar_prefetch = 0 : i64, scratch_operands = 0 : i64, tpu.core_type = #tpu.core_type<tc>, window_params = [{transform_indices = @transform_0, window_bounds = array<i64: 8, 16>}, {pipeline_mode = #tpu.pipeline_mode<synchronous>, transform_indices = @transform_1, window_bounds = array<i64: 16, 128>}, {pipeline_mode = #tpu.pipeline_mode<synchronous>, transform_indices = @transform_2, window_bounds = array<i64: 128, 128>}, {pipeline_mode = #tpu.pipeline_mode<synchronous>, transform_indices = @transform_3, window_bounds = array<i64: 1, 128>}, {transform_indices = @transform_4, window_bounds = array<i64: 8, 128>}, {transform_indices = @transform_5, window_bounds = array<i64: 8, 128>}]} {
    %c0 = arith.constant 0 : index
    %c0_0 = arith.constant 0 : index
    %0 = vector.load %arg1[%c0, %c0_0] : memref<8x16xf32, #tpu.memory_space<vmem>>, vector<8x16xf32>
    %c0_1 = arith.constant 0 : index
    %c0_2 = arith.constant 0 : index
    %1 = vector.load %arg2[%c0_1, %c0_2] : memref<16x128xf32, #tpu.memory_space<vmem>>, vector<16x128xf32>
    %cst = arith.constant dense<0.000000e+00> : vector<8x128xf32>
    %2 = tpu.matmul %0, %1, %cst {dimension_numbers = #tpu.dot_dimension_numbers<[1], [0], [0], [1], [0, 0, 1, 1], [], []>} : vector<8x16xf32>, vector<16x128xf32>, vector<8x128xf32> -> vector<8x128xf32>
    %c0_3 = arith.constant 0 : index
    %c0_4 = arith.constant 0 : index
    %3 = vector.load %arg4[%c0_3, %c0_4] : memref<1x128xf32, #tpu.memory_space<vmem>>, vector<1x128xf32>
    %4 = vector.broadcast %3 : vector<1x128xf32> to vector<8x128xf32>
    %5 = arith.addf %2, %4 : vector<8x128xf32>
    %cst_5 = arith.constant dense<0xFF800000> : vector<8xf32>
    %6 = vector.multi_reduction <maximumf>, %5, %cst_5 [1] : vector<8x128xf32> to vector<8xf32>
    %7 = vector.shape_cast %6 : vector<8xf32> to vector<8x1xf32>
    %8 = vector.broadcast %7 : vector<8x1xf32> to vector<8x128xf32>
    %9 = arith.cmpf oeq, %5, %8 : vector<8x128xf32>
    %cst_6 = arith.constant 0xFF800000 : f32
    %10 = vector.broadcast %cst_6 : f32 to vector<8x128xf32>
    %11 = arith.select %9, %10, %5 : vector<8x128xi1>, vector<8x128xf32>
    %cst_7 = arith.constant dense<0xFF800000> : vector<8xf32>
    %12 = vector.multi_reduction <maximumf>, %11, %cst_7 [1] : vector<8x128xf32> to vector<8xf32>
    %13 = vector.shape_cast %12 : vector<8xf32> to vector<8x1xf32>
    %14 = vector.broadcast %13 : vector<8x1xf32> to vector<8x128xf32>
    %15 = arith.cmpf oge, %5, %14 : vector<8x128xf32>
    %cst_8 = arith.constant 0.000000e+00 : f32
    %16 = vector.broadcast %cst_8 : f32 to vector<8x128xf32>
    %17 = arith.select %15, %2, %16 : vector<8x128xi1>, vector<8x128xf32>
    %c0_9 = arith.constant 0 : index
    %c0_10 = arith.constant 0 : index
    %18 = vector.load %arg6[%c0_9, %c0_10] : memref<8x128xf32, #tpu.memory_space<vmem>>, vector<8x128xf32>
    tpu.vector_store %arg6[%c0_9, %c0_10], %17 {strides = array<i32>} : memref<8x128xf32, #tpu.memory_space<vmem>>, vector<8x128xf32>,
    %c0_11 = arith.constant 0 : index
    %c0_12 = arith.constant 0 : index
    %19 = vector.load %arg3[%c0_11, %c0_12] : memref<128x128xf32, #tpu.memory_space<vmem>>, vector<128x128xf32>
    %cst_13 = arith.constant dense<0.000000e+00> : vector<8x128xf32>
    %20 = tpu.matmul %17, %19, %cst_13 {dimension_numbers = #tpu.dot_dimension_numbers<[1], [0], [0], [1], [0, 0, 1, 1], [], []>} : vector<8x128xf32>, vector<128x128xf32>, vector<8x128xf32> -> vector<8x128xf32>
    %c0_14 = arith.constant 0 : index
    %c0_15 = arith.constant 0 : index
    %21 = vector.load %arg5[%c0_14, %c0_15] : memref<8x128xf32, #tpu.memory_space<vmem>>, vector<8x128xf32>
    tpu.vector_store %arg5[%c0_14, %c0_15], %20 {strides = array<i32>} : memref<8x128xf32, #tpu.memory_space<vmem>>, vector<8x128xf32>,
    return
  }
  func.func @transform_0(%arg0: i32) -> (i32, i32) {
    %c0_i32 = arith.constant 0 : i32
    %c0_i32_0 = arith.constant 0 : i32
    return %arg0, %c0_i32 : i32, i32
  }
  func.func @transform_1(%arg0: i32) -> (i32, i32) {
    %c0_i32 = arith.constant 0 : i32
    %c0_i32_0 = arith.constant 0 : i32
    %c0_i32_1 = arith.constant 0 : i32
    return %c0_i32, %c0_i32_0 : i32, i32
  }
  func.func @transform_2(%arg0: i32) -> (i32, i32) {
    %c0_i32 = arith.constant 0 : i32
    %c0_i32_0 = arith.constant 0 : i32
    %c0_i32_1 = arith.constant 0 : i32
    return %c0_i32, %c0_i32_0 : i32, i32
  }
  func.func @transform_3(%arg0: i32) -> (i32, i32) {
    %c0_i32 = arith.constant 0 : i32
    %c0_i32_0 = arith.constant 0 : i32
    %c0_i32_1 = arith.constant 0 : i32
    return %c0_i32, %c0_i32_0 : i32, i32
  }
  func.func @transform_4(%arg0: i32) -> (i32, i32) {
    %c0_i32 = arith.constant 0 : i32
    %c0_i32_0 = arith.constant 0 : i32
    return %arg0, %c0_i32 : i32, i32
  }
  func.func @transform_5(%arg0: i32) -> (i32, i32) {
    %c0_i32 = arith.constant 0 : i32
    %c0_i32_0 = arith.constant 0 : i32
    return %arg0, %c0_i32 : i32, i32
  }
}

module attributes {stable_mosaic.version = 11 : i64} {
  func.func @_sae_kernel(%arg0: i32, %arg1: memref<8x16xf32, #tpu.memory_space<vmem>>, %arg2: memref<16x128xf32, #tpu.memory_space<vmem>>, %arg3: memref<128x128xf32, #tpu.memory_space<vmem>>, %arg4: memref<1x128xf32, #tpu.memory_space<vmem>>, %arg5: memref<8x128xf32, #tpu.memory_space<vmem>>, %arg6: memref<8x128xf32, #tpu.memory_space<vmem>>) attributes {dimension_semantics = [#tpu.dimension_semantics<parallel>], iteration_bounds = array<i64: 1>, scalar_prefetch = 0 : i64, scratch_operands = 0 : i64, tpu.core_type = #tpu.core_type<tc>, window_params = [{transform_indices = @transform_0, window_bounds = array<i64: 8, 16>}, {pipeline_mode = #tpu.pipeline_mode<synchronous>, transform_indices = @transform_1, window_bounds = array<i64: 16, 128>}, {pipeline_mode = #tpu.pipeline_mode<synchronous>, transform_indices = @transform_2, window_bounds = array<i64: 128, 128>}, {pipeline_mode = #tpu.pipeline_mode<synchronous>, transform_indices = @transform_3, window_bounds = array<i64: 1, 128>}, {transform_indices = @transform_4, window_bounds = array<i64: 8, 128>}, {transform_indices = @transform_5, window_bounds = array<i64: 8, 128>}]} {
    %c0 = arith.constant 0 : index
    %c0_0 = arith.constant 0 : index
    %0 = vector.load %arg1[%c0, %c0_0] : memref<8x16xf32, #tpu.memory_space<vmem>>, vector<8x16xf32>
    %c0_1 = arith.constant 0 : index
    %c0_2 = arith.constant 0 : index
    %1 = vector.load %arg2[%c0_1, %c0_2] : memref<16x128xf32, #tpu.memory_space<vmem>>, vector<16x128xf32>
    %cst = arith.constant dense<0.000000e+00> : vector<8x128xf32>
    %2 = tpu.matmul %0, %1, %cst {dimension_numbers = #tpu.dot_dimension_numbers<[1], [0], [0], [1], [0, 0, 1, 1], [], []>} : vector<8x16xf32>, vector<16x128xf32>, vector<8x128xf32> -> vector<8x128xf32>
    %c0_3 = arith.constant 0 : index
    %c0_4 = arith.constant 0 : index
    %3 = vector.load %arg4[%c0_3, %c0_4] : memref<1x128xf32, #tpu.memory_space<vmem>>, vector<1x128xf32>
    %4 = vector.broadcast %3 : vector<1x128xf32> to vector<8x128xf32>
    %5 = arith.addf %2, %4 : vector<8x128xf32>
    %cst_5 = arith.constant dense<0xFF800000> : vector<8xf32>
    %6 = vector.multi_reduction <maximumf>, %5, %cst_5 [1] : vector<8x128xf32> to vector<8xf32>
    %7 = vector.shape_cast %6 : vector<8xf32> to vector<8x1xf32>
    %8 = vector.broadcast %7 : vector<8x1xf32> to vector<8x128xf32>
    %9 = arith.cmpf oeq, %5, %8 : vector<8x128xf32>
    %cst_6 = arith.constant 0xFF800000 : f32
    %10 = vector.broadcast %cst_6 : f32 to vector<8x128xf32>
    %11 = arith.select %9, %10, %5 : vector<8x128xi1>, vector<8x128xf32>
    %cst_7 = arith.constant dense<0xFF800000> : vector<8xf32>
    %12 = vector.multi_reduction <maximumf>, %11, %cst_7 [1] : vector<8x128xf32> to vector<8xf32>
    %13 = vector.shape_cast %12 : vector<8xf32> to vector<8x1xf32>
    %14 = vector.broadcast %13 : vector<8x1xf32> to vector<8x128xf32>
    %15 = arith.cmpf oge, %5, %14 : vector<8x128xf32>
    %cst_8 = arith.constant 0.000000e+00 : f32
    %16 = vector.broadcast %cst_8 : f32 to vector<8x128xf32>
    %17 = arith.select %15, %2, %16 : vector<8x128xi1>, vector<8x128xf32>
    %c0_9 = arith.constant 0 : index
    %c0_10 = arith.constant 0 : index
    %18 = vector.load %arg6[%c0_9, %c0_10] : memref<8x128xf32, #tpu.memory_space<vmem>>, vector<8x128xf32>
    tpu.vector_store %arg6[%c0_9, %c0_10], %17 {strides = array<i32>} : memref<8x128xf32, #tpu.memory_space<vmem>>, vector<8x128xf32>,
    %c0_11 = arith.constant 0 : index
    %c0_12 = arith.constant 0 : index
    %19 = vector.load %arg3[%c0_11, %c0_12] : memref<128x128xf32, #tpu.memory_space<vmem>>, vector<128x128xf32>
    %cst_13 = arith.constant dense<0.000000e+00> : vector<8x128xf32>
    %20 = tpu.matmul %17, %19, %cst_13 {dimension_numbers = #tpu.dot_dimension_numbers<[1], [0], [0], [1], [0, 0, 1, 1], [], []>} : vector<8x128xf32>, vector<128x128xf32>, vector<8x128xf32> -> vector<8x128xf32>
    %c0_14 = arith.constant 0 : index
    %c0_15 = arith.constant 0 : index
    %21 = vector.load %arg5[%c0_14, %c0_15] : memref<8x128xf32, #tpu.memory_space<vmem>>, vector<8x128xf32>
    tpu.vector_store %arg5[%c0_14, %c0_15], %20 {strides = array<i32>} : memref<8x128xf32, #tpu.memory_space<vmem>>, vector<8x128xf32>,
    return
  }
  func.func @transform_0(%arg0: i32) -> (i32, i32) {
    %c0_i32 = arith.constant 0 : i32
    %c0_i32_0 = arith.constant 0 : i32
    return %arg0, %c0_i32 : i32, i32
  }
  func.func @transform_1(%arg0: i32) -> (i32, i32) {
    %c0_i32 = arith.constant 0 : i32
    %c0_i32_0 = arith.constant 0 : i32
    %c0_i32_1 = arith.constant 0 : i32
    return %c0_i32, %c0_i32_0 : i32, i32
  }
  func.func @transform_2(%arg0: i32) -> (i32, i32) {
    %c0_i32 = arith.constant 0 : i32
    %c0_i32_0 = arith.constant 0 : i32
    %c0_i32_1 = arith.constant 0 : i32
    return %c0_i32, %c0_i32_0 : i32, i32
  }
  func.func @transform_3(%arg0: i32) -> (i32, i32) {
    %c0_i32 = arith.constant 0 : i32
    %c0_i32_0 = arith.constant 0 : i32
    %c0_i32_1 = arith.constant 0 : i32
    return %c0_i32, %c0_i32_0 : i32, i32
  }
  func.func @transform_4(%arg0: i32) -> (i32, i32) {
    %c0_i32 = arith.constant 0 : i32
    %c0_i32_0 = arith.constant 0 : i32
    return %arg0, %c0_i32 : i32, i32
  }
  func.func @transform_5(%arg0: i32) -> (i32, i32) {
    %c0_i32 = arith.constant 0 : i32
    %c0_i32_0 = arith.constant 0 : i32
    return %arg0, %c0_i32 : i32, i32
  }
}

</mosaic_0001>

<llo_original>
// kernel: tpu_custom_call.1
$region0: #{tpu_custom_call.1}
  #allocation0 [shape = 'u32[]', space=smem, size = 0x4, offset = 0x4, fixed_abs, tag = 'smem constant byte address 0x4 - core index']
  #allocation1 [shape = 'u32[144,128]{1,0:T(1,128)}', space=vmem, size = 0x12000, scoped, tag = 'internal scratch']
  %s0 = inlined_call_operand.hbm [shape: f32[8,16], index: 0, kind: input, shape index: {}]
  %s1 = inlined_call_operand.hbm [shape: f32[16,128], index: 1, kind: input, shape index: {}]
  %s2 = inlined_call_operand.hbm [shape: f32[128,128], index: 2, kind: input, shape index: {}]
  %s3 = inlined_call_operand.hbm [shape: f32[1,128], index: 3, kind: input, shape index: {}]
  %s4 = inlined_call_operand.hbm [shape: f32[8,128], index: 4, kind: output, shape index: {0}]
  %s5 = inlined_call_operand.hbm [shape: f32[8,128], index: 5, kind: output, shape index: {1}]
  %6 = xla_tuple %s4, %s5
  %s7 = sld [smem:[#allocation0]]
  $region50: #{tpu_custom_call.1} parent=0
    _
  %s9 = ssub.s32 1, %s7
  %s10 = scalar_select 0, %s9, %s7
  $region1: #{tpu_custom_call.1} parent=0
    #allocation2 [shape = 'u8[4096]{0}', space=vmem, size = 0x1000, scoped, tag = 'input window, operand 0, single buffered']
    #allocation3 [shape = 's32[1]{0}', space=sflag, size = 0x4, scoped, tag = 'scoped memory for tpu_custom_call.1']
    #allocation4 [shape = 's32[1]{0}', space=sflag, size = 0x4, scoped, tag = 'scoped memory for tpu_custom_call.1']
    #allocation5 [shape = 'u8[8192]{0}', space=vmem, size = 0x2000, scoped, tag = 'input window, operand 1, single buffered']
    #allocation6 [shape = 's32[1]{0}', space=sflag, size = 0x4, scoped, tag = 'scoped memory for tpu_custom_call.1']
    #allocation7 [shape = 'u8[65536]{0}', space=vmem, size = 0x10000, scoped, tag = 'input window, operand 2, single buffered']
    #allocation8 [shape = 'u8[512]{0}', space=vmem, size = 0x400, scoped, tag = 'input window, operand 3, single buffered']
    #allocation9 [shape = 's32[1]{0}', space=sflag, size = 0x4, scoped, tag = 'scoped memory for tpu_custom_call.1']
    #allocation10 [shape = 'u8[4096]{0}', space=vmem, size = 0x1000, scoped, tag = 'output window, operand 0, single buffered']
    #allocation11 [shape = 'u8[4096]{0}', space=vmem, size = 0x1000, scoped, tag = 'output window, operand 1, single buffered']
    #allocation12 [shape = 's32[1]{0}', space=sflag, size = 0x4, scoped, tag = 'scoped memory for tpu_custom_call.1']
    %11 = vsyncpa [#allocation3], 0
    %12 = vsyncpa [#allocation6], 0
    %13 = vsyncpa [#allocation9], 0
    %14 = vsyncpa [#allocation4], 0
    %15 = vsyncpa [#allocation12], 0
    // Predicated region
    $region2: #{tpu_custom_call.1} parent=1 // pred_check
      _
    $region3: #{tpu_custom_call.1} parent=1 // pred_check_branch
      %17 = sbr.rel (0) target = $region5
    $region4: #{tpu_custom_call.1} parent=1 // pred_region
      %s19 = ssub.s32 128, 128
      %20 = vsyncadd [#allocation3], %s19
      %s22 = sshll.u32 [#allocation2], 4
      %s23 = int_to_ptr.vmem [resolvable:$true] %s22
      %25 = dma.hbm_to_vmem [thread:$0]  %s0, 128, %s23, [#allocation3]
    $region5: #{tpu_custom_call.1} parent=1 // pred_fallthru
      _
    // Predicated region
    $region6: #{tpu_custom_call.1} parent=1 // pred_check
      _
    $region7: #{tpu_custom_call.1} parent=1 // pred_check_branch
      %27 = sbr.rel (0) target = $region9
    $region8: #{tpu_custom_call.1} parent=1 // pred_region
      %s29 = ssub.s32 256, 256
      %30 = vsyncadd [#allocation6], %s29
      %s31 = sshll.u32 [#allocation5], 4
      %s32 = int_to_ptr.vmem [resolvable:$true] %s31
      %37 = dma.hbm_to_vmem [thread:$0]  %s1, 256, %s32, [#allocation6], 128, 128, 8
    $region9: #{tpu_custom_call.1} parent=1 // pred_fallthru
      _
    // Predicated region
    $region10: #{tpu_custom_call.1} parent=1 // pred_check
      _
    $region11: #{tpu_custom_call.1} parent=1 // pred_check_branch
      %39 = sbr.rel (0) target = $region13
    $region12: #{tpu_custom_call.1} parent=1 // pred_region
      %s41 = ssub.s32 2048, 2048
      %42 = vsyncadd [#allocation6], %s41
      %s43 = sshll.u32 [#allocation7], 4
      %s44 = int_to_ptr.vmem [resolvable:$true] %s43
      %49 = dma.hbm_to_vmem [thread:$0]  %s2, 2048, %s44, [#allocation6], 128, 128, 8
    $region13: #{tpu_custom_call.1} parent=1 // pred_fallthru
      _
    // Predicated region
    $region14: #{tpu_custom_call.1} parent=1 // pred_check
      _
    $region15: #{tpu_custom_call.1} parent=1 // pred_check_branch
      %51 = sbr.rel (0) target = $region17
    $region16: #{tpu_custom_call.1} parent=1 // pred_region
      %s53 = ssub.s32 16, 16
      %54 = vsyncadd [#allocation9], %s53
      %s56 = sshll.u32 [#allocation8], 4
      %s57 = int_to_ptr.vmem [resolvable:$true] %s56
      %59 = dma.hbm_to_vmem [thread:$0]  %s3, 16, %s57, [#allocation9]
    $region17: #{tpu_custom_call.1} parent=1 // pred_fallthru
      _
    // Predicated region
    $region18: #{tpu_custom_call.1} parent=1 // pred_check
      _
    $region19: #{tpu_custom_call.1} parent=1 // pred_check_branch
      %61 = sbr.rel (0) target = $region21
    $region20: #{tpu_custom_call.1} parent=1 // pred_region
      %62 = dma.done [#allocation3], 128
    $region21: #{tpu_custom_call.1} parent=1 // pred_fallthru
      _
    // Predicated region
    $region22: #{tpu_custom_call.1} parent=1 // pred_check
      _
    $region23: #{tpu_custom_call.1} parent=1 // pred_check_branch
      %64 = sbr.rel (0) target = $region25
    $region24: #{tpu_custom_call.1} parent=1 // pred_region
      %65 = dma.done [#allocation6], 256
    $region25: #{tpu_custom_call.1} parent=1 // pred_fallthru
      _
    // Predicated region
    $region26: #{tpu_custom_call.1} parent=1 // pred_check
      _
    $region27: #{tpu_custom_call.1} parent=1 // pred_check_branch
      %67 = sbr.rel (0) target = $region29
    $region28: #{tpu_custom_call.1} parent=1 // pred_region
      %68 = dma.done [#allocation6], 2048
    $region29: #{tpu_custom_call.1} parent=1 // pred_fallthru
      _
    // Predicated region
    $region30: #{tpu_custom_call.1} parent=1 // pred_check
      _
    $region31: #{tpu_custom_call.1} parent=1 // pred_check_branch
      %70 = sbr.rel (0) target = $region33
    $region32: #{tpu_custom_call.1} parent=1 // pred_region
      %71 = dma.done [#allocation9], 16
    $region33: #{tpu_custom_call.1} parent=1 // pred_fallthru
      _
    %v72 = vld [vmem:[#allocation2] sm:$0xff]
    %v73 = vld [vmem:[#allocation5] sm:$0xff]
    %v74 = vld [vmem:[#allocation5 + $0x8] sm:$0xff]
    %vm75 = vcmask 130048
    %v77 = vsel %vm75, %v72, 0
    %79 = vmatprep.subr.mxu0 0.0
    %80 = vmatpush1.msra.mxu0 %v73
    %81 = vmatprep.subr.mxu0 0.0
    %82 = vmatpush1.msra.mxu0 %v74
    %83 = vmatprep.subr.mxu0 0.0
    %84 = vmatpush1.msra.mxu0 0.0
    %85 = vmatprep.subr.mxu0 0.0
    %86 = vmatpush1.msra.mxu0 0.0
    %87 = vmatprep.subr.mxu0 0.0
    %88 = vmatpush1.msra.mxu0 0.0
    %89 = vmatprep.subr.mxu0 0.0
    %90 = vmatpush1.msra.mxu0 0.0
    %91 = vmatprep.subr.mxu0 0.0
    %92 = vmatpush1.msra.mxu0 0.0
    %93 = vmatprep.subr.mxu0 0.0
    %94 = vmatpush1.msra.mxu0 0.0
    %95 = vmatprep.subr.mxu0 0.0
    %96 = vmatpush1.msra.mxu0 0.0
    %97 = vmatprep.subr.mxu0 0.0
    %98 = vmatpush1.msra.mxu0 0.0
    %99 = vmatprep.subr.mxu0 0.0
    %100 = vmatpush1.msra.mxu0 0.0
    %101 = vmatprep.subr.mxu0 0.0
    %102 = vmatpush1.msra.mxu0 0.0
    %103 = vmatprep.subr.mxu0 0.0
    %104 = vmatpush1.msra.mxu0 0.0
    %105 = vmatprep.subr.mxu0 0.0
    %106 = vmatpush1.msra.mxu0 0.0
    %107 = vmatprep.subr.mxu0 0.0
    %108 = vmatpush1.msra.mxu0 0.0
    %109 = vmatprep.subr.mxu0 0.0
    %110 = vmatpush1.msra.mxu0 0.0
    %111 = vmatprep.subr.mxu0 0.0
    %112 = vmatpush1.msra.mxu0 0.0
    %113 = vmatprep.subr.mxu0 0.0
    %114 = vmatpush1.msra.mxu0 0.0
    %115 = vmatprep.subr.mxu0 0.0
    %116 = vmatpush1.msra.mxu0 0.0
    %117 = vmatprep.subr.mxu0 0.0
    %118 = vmatpush1.msra.mxu0 0.0
    %119 = vmatprep.subr.mxu0 0.0
    %120 = vmatpush1.msra.mxu0 0.0
    %121 = vmatprep.subr.mxu0 0.0
    %122 = vmatpush1.msra.mxu0 0.0
    %123 = vmatprep.subr.mxu0 0.0
    %124 = vmatpush1.msra.mxu0 0.0
    %125 = vmatprep.subr.mxu0 0.0
    %126 = vmatpush1.msra.mxu0 0.0
    %127 = vmatprep.subr.mxu0 0.0
    %128 = vmatpush1.msra.mxu0 0.0
    %129 = vmatprep.subr.mxu0 0.0
    %130 = vmatpush1.msra.mxu0 0.0
    %131 = vmatprep.subr.mxu0 0.0
    %132 = vmatpush1.msra.mxu0 0.0
    %133 = vmatprep.subr.mxu0 0.0
    %134 = vmatpush1.msra.mxu0 0.0
    %135 = vmatprep.subr.mxu0 0.0
    %136 = vmatpush1.msra.mxu0 0.0
    %137 = vmatprep.subr.mxu0 0.0
    %138 = vmatpush1.msra.mxu0 0.0
    %139 = vmatprep.subr.mxu0 0.0
    %140 = vmatpush1.msra.mxu0 0.0
    %141 = vmatprep.subr.mxu0 0.0
    %142 = vmatpush1.msra.mxu0 0.0
    %143 = vmatprep.mubr.f32.mxu0 0.0
    %144 = vmatmul.mubr.f32.gmra.mrb[0].mxu0 %v77
    %v145 = vpop.f32.mrb[0].mxu0
    %v146 = vadd.f32 0.0, %v145
    %v147 = vpop.f32.mrb[0].mxu0
    %148 = vdwg.mxu0
    %v149 = vld [vmem:[#allocation8] sm:$0x1]
    %v151 = vlaneseq
    %v152 = vshrl.u32 %v151, 7
    %v153 = vsub.s32 0, %v152
    %v154 = vrot.slane %v149, %v153
    %v156 = vadd.f32 %v146, %v154
    %157 = vmax.xlane.f32.xlu0 %v156
    %v158 = vpop.xlane.xlu0 %157
    %vm159 = vcmp.eq.f32.partialorder %v156, %v158
    %v160 = vsel %vm159, -inf, %v156
    %161 = vmax.xlane.f32.xlu0 %v160
    %v162 = vpop.xlane.xlu0 %161
    %vm163 = vcmp.ge.f32.partialorder %v156, %v162
    %v164 = vsel %vm163, %v146, 0.0
    %165 = vst [vmem:[#allocation11] sm:$0xff] %v164
    %v166 = vld [vmem:[#allocation7] sm:$0xff]
    %v167 = vld [vmem:[#allocation7 + $0x8] sm:$0xff]
    %v168 = vld [vmem:[#allocation7 + $0x10] sm:$0xff]
    %v169 = vld [vmem:[#allocation7 + $0x18] sm:$0xff]
    %v170 = vld [vmem:[#allocation7 + $0x20] sm:$0xff]
    %v171 = vld [vmem:[#allocation7 + $0x28] sm:$0xff]
    %v172 = vld [vmem:[#allocation7 + $0x30] sm:$0xff]
    %v173 = vld [vmem:[#allocation7 + $0x38] sm:$0xff]
    %v174 = vld [vmem:[#allocation7 + $0x40] sm:$0xff]
    %v175 = vld [vmem:[#allocation7 + $0x48] sm:$0xff]
    %v176 = vld [vmem:[#allocation7 + $0x50] sm:$0xff]
    %v177 = vld [vmem:[#allocation7 + $0x58] sm:$0xff]
    %v178 = vld [vmem:[#allocation7 + $0x60] sm:$0xff]
    %v179 = vld [vmem:[#allocation7 + $0x68] sm:$0xff]
    %v180 = vld [vmem:[#allocation7 + $0x70] sm:$0xff]
    %v181 = vld [vmem:[#allocation7 + $0x78] sm:$0xff]
    %182 = vmatprep.subr.mxu0 0.0
    %183 = vmatpush1.msra.mxu0 %v166
    %184 = vmatprep.subr.mxu0 0.0
    %185 = vmatpush1.msra.mxu0 %v167
    %186 = vmatprep.subr.mxu0 0.0
    %187 = vmatpush1.msra.mxu0 %v168
    %188 = vmatprep.subr.mxu0 0.0
    %189 = vmatpush1.msra.mxu0 %v169
    %190 = vmatprep.subr.mxu0 0.0
    %191 = vmatpush1.msra.mxu0 %v170
    %192 = vmatprep.subr.mxu0 0.0
    %193 = vmatpush1.msra.mxu0 %v171
    %194 = vmatprep.subr.mxu0 0.0
    %195 = vmatpush1.msra.mxu0 %v172
    %196 = vmatprep.subr.mxu0 0.0
    %197 = vmatpush1.msra.mxu0 %v173
    %198 = vmatprep.subr.mxu0 0.0
    %199 = vmatpush1.msra.mxu0 %v174
    %200 = vmatprep.subr.mxu0 0.0
    %201 = vmatpush1.msra.mxu0 %v175
    %202 = vmatprep.subr.mxu0 0.0
    %203 = vmatpush1.msra.mxu0 %v176
    %204 = vmatprep.subr.mxu0 0.0
    %205 = vmatpush1.msra.mxu0 %v177
    %206 = vmatprep.subr.mxu0 0.0
    %207 = vmatpush1.msra.mxu0 %v178
    %208 = vmatprep.subr.mxu0 0.0
    %209 = vmatpush1.msra.mxu0 %v179
    %210 = vmatprep.subr.mxu0 0.0
    %211 = vmatpush1.msra.mxu0 %v180
    %212 = vmatprep.subr.mxu0 0.0
    %213 = vmatpush1.msra.mxu0 %v181
    %214 = vmatprep.subr.mxu0 0.0
    %215 = vmatpush1.msra.mxu0 0.0
    %216 = vmatprep.subr.mxu0 0.0
    %217 = vmatpush1.msra.mxu0 0.0
    %218 = vmatprep.subr.mxu0 0.0
    %219 = vmatpush1.msra.mxu0 0.0
    %220 = vmatprep.subr.mxu0 0.0
    %221 = vmatpush1.msra.mxu0 0.0
    %222 = vmatprep.subr.mxu0 0.0
    %223 = vmatpush1.msra.mxu0 0.0
    %224 = vmatprep.subr.mxu0 0.0
    %225 = vmatpush1.msra.mxu0 0.0
    %226 = vmatprep.subr.mxu0 0.0
    %227 = vmatpush1.msra.mxu0 0.0
    %228 = vmatprep.subr.mxu0 0.0
    %229 = vmatpush1.msra.mxu0 0.0
    %230 = vmatprep.subr.mxu0 0.0
    %231 = vmatpush1.msra.mxu0 0.0
    %232 = vmatprep.subr.mxu0 0.0
    %233 = vmatpush1.msra.mxu0 0.0
    %234 = vmatprep.subr.mxu0 0.0
    %235 = vmatpush1.msra.mxu0 0.0
    %236 = vmatprep.subr.mxu0 0.0
    %237 = vmatpush1.msra.mxu0 0.0
    %238 = vmatprep.subr.mxu0 0.0
    %239 = vmatpush1.msra.mxu0 0.0
    %240 = vmatprep.subr.mxu0 0.0
    %241 = vmatpush1.msra.mxu0 0.0
    %242 = vmatprep.subr.mxu0 0.0
    %243 = vmatpush1.msra.mxu0 0.0
    %244 = vmatprep.subr.mxu0 0.0
    %245 = vmatpush1.msra.mxu0 0.0
    %246 = vmatprep.mubr.f32.mxu0 0.0
    %247 = vmatmul.mubr.f32.gmra.mrb[0].mxu0 %v164
    %v248 = vpop.f32.mrb[0].mxu0
    %v249 = vadd.f32 0.0, %v248
    %v250 = vpop.f32.mrb[0].mxu0
    %251 = vdwg.mxu0
    %252 = vst [vmem:[#allocation10] sm:$0xff] %v249
    // Predicated region
    $region34: #{tpu_custom_call.1} parent=1 // pred_check
      _
    $region35: #{tpu_custom_call.1} parent=1 // pred_check_branch
      %254 = sbr.rel (0) target = $region37
    $region36: #{tpu_custom_call.1} parent=1 // pred_region
      %s256 = ssub.s32 128, 128
      %257 = vsyncadd [#allocation4], %s256
      %s259 = sshll.u32 [#allocation10], 4
      %s260 = int_to_ptr.vmem [resolvable:$true] %s259
      %262 = dma.vmem_to_hbm [thread:$0]  %s260, 128, %s4, [#allocation4]
    $region37: #{tpu_custom_call.1} parent=1 // pred_fallthru
      _
    // Predicated region
    $region38: #{tpu_custom_call.1} parent=1 // pred_check
      _
    $region39: #{tpu_custom_call.1} parent=1 // pred_check_branch
      %264 = sbr.rel (0) target = $region41
    $region40: #{tpu_custom_call.1} parent=1 // pred_region
      %s266 = ssub.s32 128, 128
      %267 = vsyncadd [#allocation12], %s266
      %s269 = sshll.u32 [#allocation11], 4
      %s270 = int_to_ptr.vmem [resolvable:$true] %s269
      %272 = dma.vmem_to_hbm [thread:$0]  %s270, 128, %s5, [#allocation12]
    $region41: #{tpu_custom_call.1} parent=1 // pred_fallthru
      _
    // Predicated region
    $region42: #{tpu_custom_call.1} parent=1 // pred_check
      _
    $region43: #{tpu_custom_call.1} parent=1 // pred_check_branch
      %274 = sbr.rel (0) target = $region45
    $region44: #{tpu_custom_call.1} parent=1 // pred_region
      %275 = dma.done [#allocation4], 128
    $region45: #{tpu_custom_call.1} parent=1 // pred_fallthru
      _
    // Predicated region
    $region46: #{tpu_custom_call.1} parent=1 // pred_check
      _
    $region47: #{tpu_custom_call.1} parent=1 // pred_check_branch
      %277 = sbr.rel (0) target = $region49
    $region48: #{tpu_custom_call.1} parent=1 // pred_region
      %278 = dma.done [#allocation12], 128
    $region49: #{tpu_custom_call.1} parent=1 // pred_fallthru
      _
    %279 = vsyncpa [#allocation3], 1
    %280 = vsyncpa [#allocation6], 1
    %281 = vsyncpa [#allocation9], 1
    %282 = vsyncpa [#allocation4], 1
    %283 = vsyncpa [#allocation12], 1

// kernel: tpu_custom_call.1
$region0: #{tpu_custom_call.1}
  #allocation0 [shape = 'u32[]', space=smem, size = 0x4, offset = 0x4, fixed_abs, tag = 'smem constant byte address 0x4 - core index']
  #allocation1 [shape = 'u32[144,128]{1,0:T(1,128)}', space=vmem, size = 0x12000, scoped, tag = 'internal scratch']
  %s0 = inlined_call_operand.hbm [shape: f32[8,16], index: 0, kind: input, shape index: {}]
  %s1 = inlined_call_operand.hbm [shape: f32[16,128], index: 1, kind: input, shape index: {}]
  %s2 = inlined_call_operand.hbm [shape: f32[128,128], index: 2, kind: input, shape index: {}]
  %s3 = inlined_call_operand.hbm [shape: f32[1,128], index: 3, kind: input, shape index: {}]
  %s4 = inlined_call_operand.hbm [shape: f32[8,128], index: 4, kind: output, shape index: {0}]
  %s5 = inlined_call_operand.hbm [shape: f32[8,128], index: 5, kind: output, shape index: {1}]
  %6 = xla_tuple %s4, %s5
  %s7 = sld [smem:[#allocation0]]
  $region50: #{tpu_custom_call.1} parent=0
    _
  %s9 = ssub.s32 1, %s7
  %s10 = scalar_select 0, %s9, %s7
  $region1: #{tpu_custom_call.1} parent=0
    #allocation2 [shape = 'u8[4096]{0}', space=vmem, size = 0x1000, scoped, tag = 'input window, operand 0, single buffered']
    #allocation3 [shape = 's32[1]{0}', space=sflag, size = 0x4, scoped, tag = 'scoped memory for tpu_custom_call.1']
    #allocation4 [shape = 's32[1]{0}', space=sflag, size = 0x4, scoped, tag = 'scoped memory for tpu_custom_call.1']
    #allocation5 [shape = 'u8[8192]{0}', space=vmem, size = 0x2000, scoped, tag = 'input window, operand 1, single buffered']
    #allocation6 [shape = 's32[1]{0}', space=sflag, size = 0x4, scoped, tag = 'scoped memory for tpu_custom_call.1']
    #allocation7 [shape = 'u8[65536]{0}', space=vmem, size = 0x10000, scoped, tag = 'input window, operand 2, single buffered']
    #allocation8 [shape = 'u8[512]{0}', space=vmem, size = 0x400, scoped, tag = 'input window, operand 3, single buffered']
    #allocation9 [shape = 's32[1]{0}', space=sflag, size = 0x4, scoped, tag = 'scoped memory for tpu_custom_call.1']
    #allocation10 [shape = 'u8[4096]{0}', space=vmem, size = 0x1000, scoped, tag = 'output window, operand 0, single buffered']
    #allocation11 [shape = 'u8[4096]{0}', space=vmem, size = 0x1000, scoped, tag = 'output window, operand 1, single buffered']
    #allocation12 [shape = 's32[1]{0}', space=sflag, size = 0x4, scoped, tag = 'scoped memory for tpu_custom_call.1']
    %11 = vsyncpa [#allocation3], 0
    %12 = vsyncpa [#allocation6], 0
    %13 = vsyncpa [#allocation9], 0
    %14 = vsyncpa [#allocation4], 0
    %15 = vsyncpa [#allocation12], 0
    // Predicated region
    $region2: #{tpu_custom_call.1} parent=1 // pred_check
      _
    $region3: #{tpu_custom_call.1} parent=1 // pred_check_branch
      %17 = sbr.rel (0) target = $region5
    $region4: #{tpu_custom_call.1} parent=1 // pred_region
      %s19 = ssub.s32 128, 128
      %20 = vsyncadd [#allocation3], %s19
      %s22 = sshll.u32 [#allocation2], 4
      %s23 = int_to_ptr.vmem [resolvable:$true] %s22
      %25 = dma.hbm_to_vmem [thread:$0]  %s0, 128, %s23, [#allocation3]
    $region5: #{tpu_custom_call.1} parent=1 // pred_fallthru
      _
    // Predicated region
    $region6: #{tpu_custom_call.1} parent=1 // pred_check
      _
    $region7: #{tpu_custom_call.1} parent=1 // pred_check_branch
      %27 = sbr.rel (0) target = $region9
    $region8: #{tpu_custom_call.1} parent=1 // pred_region
      %s29 = ssub.s32 256, 256
      %30 = vsyncadd [#allocation6], %s29
      %s31 = sshll.u32 [#allocation5], 4
      %s32 = int_to_ptr.vmem [resolvable:$true] %s31
      %37 = dma.hbm_to_vmem [thread:$0]  %s1, 256, %s32, [#allocation6], 128, 128, 8
    $region9: #{tpu_custom_call.1} parent=1 // pred_fallthru
      _
    // Predicated region
    $region10: #{tpu_custom_call.1} parent=1 // pred_check
      _
    $region11: #{tpu_custom_call.1} parent=1 // pred_check_branch
      %39 = sbr.rel (0) target = $region13
    $region12: #{tpu_custom_call.1} parent=1 // pred_region
      %s41 = ssub.s32 2048, 2048
      %42 = vsyncadd [#allocation6], %s41
      %s43 = sshll.u32 [#allocation7], 4
      %s44 = int_to_ptr.vmem [resolvable:$true] %s43
      %49 = dma.hbm_to_vmem [thread:$0]  %s2, 2048, %s44, [#allocation6], 128, 128, 8
    $region13: #{tpu_custom_call.1} parent=1 // pred_fallthru
      _
    // Predicated region
    $region14: #{tpu_custom_call.1} parent=1 // pred_check
      _
    $region15: #{tpu_custom_call.1} parent=1 // pred_check_branch
      %51 = sbr.rel (0) target = $region17
    $region16: #{tpu_custom_call.1} parent=1 // pred_region
      %s53 = ssub.s32 16, 16
      %54 = vsyncadd [#allocation9], %s53
      %s56 = sshll.u32 [#allocation8], 4
      %s57 = int_to_ptr.vmem [resolvable:$true] %s56
      %59 = dma.hbm_to_vmem [thread:$0]  %s3, 16, %s57, [#allocation9]
    $region17: #{tpu_custom_call.1} parent=1 // pred_fallthru
      _
    // Predicated region
    $region18: #{tpu_custom_call.1} parent=1 // pred_check
      _
    $region19: #{tpu_custom_call.1} parent=1 // pred_check_branch
      %61 = sbr.rel (0) target = $region21
    $region20: #{tpu_custom_call.1} parent=1 // pred_region
      %62 = dma.done [#allocation3], 128
    $region21: #{tpu_custom_call.1} parent=1 // pred_fallthru
      _
    // Predicated region
    $region22: #{tpu_custom_call.1} parent=1 // pred_check
      _
    $region23: #{tpu_custom_call.1} parent=1 // pred_check_branch
      %64 = sbr.rel (0) target = $region25
    $region24: #{tpu_custom_call.1} parent=1 // pred_region
      %65 = dma.done [#allocation6], 256
    $region25: #{tpu_custom_call.1} parent=1 // pred_fallthru
      _
    // Predicated region
    $region26: #{tpu_custom_call.1} parent=1 // pred_check
      _
    $region27: #{tpu_custom_call.1} parent=1 // pred_check_branch
      %67 = sbr.rel (0) target = $region29
    $region28: #{tpu_custom_call.1} parent=1 // pred_region
      %68 = dma.done [#allocation6], 2048
    $region29: #{tpu_custom_call.1} parent=1 // pred_fallthru
      _
    // Predicated region
    $region30: #{tpu_custom_call.1} parent=1 // pred_check
      _
    $region31: #{tpu_custom_call.1} parent=1 // pred_check_branch
      %70 = sbr.rel (0) target = $region33
    $region32: #{tpu_custom_call.1} parent=1 // pred_region
      %71 = dma.done [#allocation9], 16
    $region33: #{tpu_custom_call.1} parent=1 // pred_fallthru
      _
    %v72 = vld [vmem:[#allocation2] sm:$0xff]
    %v73 = vld [vmem:[#allocation5] sm:$0xff]
    %v74 = vld [vmem:[#allocation5 + $0x8] sm:$0xff]
    %vm75 = vcmask 130048
    %v77 = vsel %vm75, %v72, 0
    %79 = vmatprep.subr.mxu0 0.0
    %80 = vmatpush1.msra.mxu0 %v73
    %81 = vmatprep.subr.mxu0 0.0
    %82 = vmatpush1.msra.mxu0 %v74
    %83 = vmatprep.subr.mxu0 0.0
    %84 = vmatpush1.msra.mxu0 0.0
    %85 = vmatprep.subr.mxu0 0.0
    %86 = vmatpush1.msra.mxu0 0.0
    %87 = vmatprep.subr.mxu0 0.0
    %88 = vmatpush1.msra.mxu0 0.0
    %89 = vmatprep.subr.mxu0 0.0
    %90 = vmatpush1.msra.mxu0 0.0
    %91 = vmatprep.subr.mxu0 0.0
    %92 = vmatpush1.msra.mxu0 0.0
    %93 = vmatprep.subr.mxu0 0.0
    %94 = vmatpush1.msra.mxu0 0.0
    %95 = vmatprep.subr.mxu0 0.0
    %96 = vmatpush1.msra.mxu0 0.0
    %97 = vmatprep.subr.mxu0 0.0
    %98 = vmatpush1.msra.mxu0 0.0
    %99 = vmatprep.subr.mxu0 0.0
    %100 = vmatpush1.msra.mxu0 0.0
    %101 = vmatprep.subr.mxu0 0.0
    %102 = vmatpush1.msra.mxu0 0.0
    %103 = vmatprep.subr.mxu0 0.0
    %104 = vmatpush1.msra.mxu0 0.0
    %105 = vmatprep.subr.mxu0 0.0
    %106 = vmatpush1.msra.mxu0 0.0
    %107 = vmatprep.subr.mxu0 0.0
    %108 = vmatpush1.msra.mxu0 0.0
    %109 = vmatprep.subr.mxu0 0.0
    %110 = vmatpush1.msra.mxu0 0.0
    %111 = vmatprep.subr.mxu0 0.0
    %112 = vmatpush1.msra.mxu0 0.0
    %113 = vmatprep.subr.mxu0 0.0
    %114 = vmatpush1.msra.mxu0 0.0
    %115 = vmatprep.subr.mxu0 0.0
    %116 = vmatpush1.msra.mxu0 0.0
    %117 = vmatprep.subr.mxu0 0.0
    %118 = vmatpush1.msra.mxu0 0.0
    %119 = vmatprep.subr.mxu0 0.0
    %120 = vmatpush1.msra.mxu0 0.0
    %121 = vmatprep.subr.mxu0 0.0
    %122 = vmatpush1.msra.mxu0 0.0
    %123 = vmatprep.subr.mxu0 0.0
    %124 = vmatpush1.msra.mxu0 0.0
    %125 = vmatprep.subr.mxu0 0.0
    %126 = vmatpush1.msra.mxu0 0.0
    %127 = vmatprep.subr.mxu0 0.0
    %128 = vmatpush1.msra.mxu0 0.0
    %129 = vmatprep.subr.mxu0 0.0
    %130 = vmatpush1.msra.mxu0 0.0
    %131 = vmatprep.subr.mxu0 0.0
    %132 = vmatpush1.msra.mxu0 0.0
    %133 = vmatprep.subr.mxu0 0.0
    %134 = vmatpush1.msra.mxu0 0.0
    %135 = vmatprep.subr.mxu0 0.0
    %136 = vmatpush1.msra.mxu0 0.0
    %137 = vmatprep.subr.mxu0 0.0
    %138 = vmatpush1.msra.mxu0 0.0
    %139 = vmatprep.subr.mxu0 0.0
    %140 = vmatpush1.msra.mxu0 0.0
    %141 = vmatprep.subr.mxu0 0.0
    %142 = vmatpush1.msra.mxu0 0.0
    %143 = vmatprep.mubr.f32.mxu0 0.0
    %144 = vmatmul.mubr.f32.gmra.mrb[0].mxu0 %v77
    %v145 = vpop.f32.mrb[0].mxu0
    %v146 = vadd.f32 0.0, %v145
    %v147 = vpop.f32.mrb[0].mxu0
    %148 = vdwg.mxu0
    %v149 = vld [vmem:[#allocation8] sm:$0x1]
    %v151 = vlaneseq
    %v152 = vshrl.u32 %v151, 7
    %v153 = vsub.s32 0, %v152
    %v154 = vrot.slane %v149, %v153
    %v156 = vadd.f32 %v146, %v154
    %157 = vmax.xlane.f32.xlu0 %v156
    %v158 = vpop.xlane.xlu0 %157
    %vm159 = vcmp.eq.f32.partialorder %v156, %v158
    %v160 = vsel %vm159, -inf, %v156
    %161 = vmax.xlane.f32.xlu0 %v160
    %v162 = vpop.xlane.xlu0 %161
    %vm163 = vcmp.ge.f32.partialorder %v156, %v162
    %v164 = vsel %vm163, %v146, 0.0
    %165 = vst [vmem:[#allocation11] sm:$0xff] %v164
    %v166 = vld [vmem:[#allocation7] sm:$0xff]
    %v167 = vld [vmem:[#allocation7 + $0x8] sm:$0xff]
    %v168 = vld [vmem:[#allocation7 + $0x10] sm:$0xff]
    %v169 = vld [vmem:[#allocation7 + $0x18] sm:$0xff]
    %v170 = vld [vmem:[#allocation7 + $0x20] sm:$0xff]
    %v171 = vld [vmem:[#allocation7 + $0x28] sm:$0xff]
    %v172 = vld [vmem:[#allocation7 + $0x30] sm:$0xff]
    %v173 = vld [vmem:[#allocation7 + $0x38] sm:$0xff]
    %v174 = vld [vmem:[#allocation7 + $0x40] sm:$0xff]
    %v175 = vld [vmem:[#allocation7 + $0x48] sm:$0xff]
    %v176 = vld [vmem:[#allocation7 + $0x50] sm:$0xff]
    %v177 = vld [vmem:[#allocation7 + $0x58] sm:$0xff]
    %v178 = vld [vmem:[#allocation7 + $0x60] sm:$0xff]
    %v179 = vld [vmem:[#allocation7 + $0x68] sm:$0xff]
    %v180 = vld [vmem:[#allocation7 + $0x70] sm:$0xff]
    %v181 = vld [vmem:[#allocation7 + $0x78] sm:$0xff]
    %182 = vmatprep.subr.mxu0 0.0
    %183 = vmatpush1.msra.mxu0 %v166
    %184 = vmatprep.subr.mxu0 0.0
    %185 = vmatpush1.msra.mxu0 %v167
    %186 = vmatprep.subr.mxu0 0.0
    %187 = vmatpush1.msra.mxu0 %v168
    %188 = vmatprep.subr.mxu0 0.0
    %189 = vmatpush1.msra.mxu0 %v169
    %190 = vmatprep.subr.mxu0 0.0
    %191 = vmatpush1.msra.mxu0 %v170
    %192 = vmatprep.subr.mxu0 0.0
    %193 = vmatpush1.msra.mxu0 %v171
    %194 = vmatprep.subr.mxu0 0.0
    %195 = vmatpush1.msra.mxu0 %v172
    %196 = vmatprep.subr.mxu0 0.0
    %197 = vmatpush1.msra.mxu0 %v173
    %198 = vmatprep.subr.mxu0 0.0
    %199 = vmatpush1.msra.mxu0 %v174
    %200 = vmatprep.subr.mxu0 0.0
    %201 = vmatpush1.msra.mxu0 %v175
    %202 = vmatprep.subr.mxu0 0.0
    %203 = vmatpush1.msra.mxu0 %v176
    %204 = vmatprep.subr.mxu0 0.0
    %205 = vmatpush1.msra.mxu0 %v177
    %206 = vmatprep.subr.mxu0 0.0
    %207 = vmatpush1.msra.mxu0 %v178
    %208 = vmatprep.subr.mxu0 0.0
    %209 = vmatpush1.msra.mxu0 %v179
    %210 = vmatprep.subr.mxu0 0.0
    %211 = vmatpush1.msra.mxu0 %v180
    %212 = vmatprep.subr.mxu0 0.0
    %213 = vmatpush1.msra.mxu0 %v181
    %214 = vmatprep.subr.mxu0 0.0
    %215 = vmatpush1.msra.mxu0 0.0
    %216 = vmatprep.subr.mxu0 0.0
    %217 = vmatpush1.msra.mxu0 0.0
    %218 = vmatprep.subr.mxu0 0.0
    %219 = vmatpush1.msra.mxu0 0.0
    %220 = vmatprep.subr.mxu0 0.0
    %221 = vmatpush1.msra.mxu0 0.0
    %222 = vmatprep.subr.mxu0 0.0
    %223 = vmatpush1.msra.mxu0 0.0
    %224 = vmatprep.subr.mxu0 0.0
    %225 = vmatpush1.msra.mxu0 0.0
    %226 = vmatprep.subr.mxu0 0.0
    %227 = vmatpush1.msra.mxu0 0.0
    %228 = vmatprep.subr.mxu0 0.0
    %229 = vmatpush1.msra.mxu0 0.0
    %230 = vmatprep.subr.mxu0 0.0
    %231 = vmatpush1.msra.mxu0 0.0
    %232 = vmatprep.subr.mxu0 0.0
    %233 = vmatpush1.msra.mxu0 0.0
    %234 = vmatprep.subr.mxu0 0.0
    %235 = vmatpush1.msra.mxu0 0.0
    %236 = vmatprep.subr.mxu0 0.0
    %237 = vmatpush1.msra.mxu0 0.0
    %238 = vmatprep.subr.mxu0 0.0
    %239 = vmatpush1.msra.mxu0 0.0
    %240 = vmatprep.subr.mxu0 0.0
    %241 = vmatpush1.msra.mxu0 0.0
    %242 = vmatprep.subr.mxu0 0.0
    %243 = vmatpush1.msra.mxu0 0.0
    %244 = vmatprep.subr.mxu0 0.0
    %245 = vmatpush1.msra.mxu0 0.0
    %246 = vmatprep.mubr.f32.mxu0 0.0
    %247 = vmatmul.mubr.f32.gmra.mrb[0].mxu0 %v164
    %v248 = vpop.f32.mrb[0].mxu0
    %v249 = vadd.f32 0.0, %v248
    %v250 = vpop.f32.mrb[0].mxu0
    %251 = vdwg.mxu0
    %252 = vst [vmem:[#allocation10] sm:$0xff] %v249
    // Predicated region
    $region34: #{tpu_custom_call.1} parent=1 // pred_check
      _
    $region35: #{tpu_custom_call.1} parent=1 // pred_check_branch
      %254 = sbr.rel (0) target = $region37
    $region36: #{tpu_custom_call.1} parent=1 // pred_region
      %s256 = ssub.s32 128, 128
      %257 = vsyncadd [#allocation4], %s256
      %s259 = sshll.u32 [#allocation10], 4
      %s260 = int_to_ptr.vmem [resolvable:$true] %s259
      %262 = dma.vmem_to_hbm [thread:$0]  %s260, 128, %s4, [#allocation4]
    $region37: #{tpu_custom_call.1} parent=1 // pred_fallthru
      _
    // Predicated region
    $region38: #{tpu_custom_call.1} parent=1 // pred_check
      _
    $region39: #{tpu_custom_call.1} parent=1 // pred_check_branch
      %264 = sbr.rel (0) target = $region41
    $region40: #{tpu_custom_call.1} parent=1 // pred_region
      %s266 = ssub.s32 128, 128
      %267 = vsyncadd [#allocation12], %s266
      %s269 = sshll.u32 [#allocation11], 4
      %s270 = int_to_ptr.vmem [resolvable:$true] %s269
      %272 = dma.vmem_to_hbm [thread:$0]  %s270, 128, %s5, [#allocation12]
    $region41: #{tpu_custom_call.1} parent=1 // pred_fallthru
      _
    // Predicated region
    $region42: #{tpu_custom_call.1} parent=1 // pred_check
      _
    $region43: #{tpu_custom_call.1} parent=1 // pred_check_branch
      %274 = sbr.rel (0) target = $region45
    $region44: #{tpu_custom_call.1} parent=1 // pred_region
      %275 = dma.done [#allocation4], 128
    $region45: #{tpu_custom_call.1} parent=1 // pred_fallthru
      _
    // Predicated region
    $region46: #{tpu_custom_call.1} parent=1 // pred_check
      _
    $region47: #{tpu_custom_call.1} parent=1 // pred_check_branch
      %277 = sbr.rel (0) target = $region49
    $region48: #{tpu_custom_call.1} parent=1 // pred_region
      %278 = dma.done [#allocation12], 128
    $region49: #{tpu_custom_call.1} parent=1 // pred_fallthru
      _
    %279 = vsyncpa [#allocation3], 1
    %280 = vsyncpa [#allocation6], 1
    %281 = vsyncpa [#allocation9], 1
    %282 = vsyncpa [#allocation4], 1
    %283 = vsyncpa [#allocation12], 1

</llo_original>
